<compile_context>
chip_gen: v7x
topology: tpu7x:2x2x1
jax: 0.10.0
libtpu: 0.0.40
codegen_flags: <defaults>
</compile_context>

<pallas_src>
from functools import partial

import jax
import jax.numpy as jnp
from jax.experimental import pallas as pl
from jax.experimental.pallas import tpu as pltpu

# ---------------------------------------------------------------------------
# FIXED_CONFIG analog: per-augmentation, per-severity (1..5) parameters.
# ---------------------------------------------------------------------------
FIXED_CONFIG = {
    "toy_dataset": {
        "gaussian_noise": [(0.04,), (0.06,), (0.08,), (0.09,), (0.10,)],
        "brightness":     [(0.05,), (0.10,), (0.15,), (0.20,), (0.30,)],
        "contrast":       [(0.80,), (0.70,), (0.60,), (0.50,), (0.40,)],
    }
}
AUGMENTATIONS = ("gaussian_noise", "brightness", "contrast")
SEVERITY = 3


def _round_up(v, m):
    return (v + m - 1) // m * m


# ---------------------------------------------------------------------------
# Shared augmentation chain (used by the kernel AND the pure-JAX reference so
# the comparison is apples-to-apples).  Algebraically identical to the spec:
#   clip(x + sigma*n, 0, 1) -> clip(x + b, 0, 1) -> clip((x - mu)*c + mu, 0, 1)
# The first two clips fold into one because bright >= 0.
# ---------------------------------------------------------------------------
def _augment(x, noise_f32, sigma, bright, contrast):
    x = jnp.clip(x + sigma * noise_f32 + bright, bright, 1.0)
    mu = jnp.mean(x, axis=-1, keepdims=True)          # per-image mean
    return jnp.clip(x * contrast + mu * (1.0 - contrast), 0.0, 1.0)


# ---------------------------------------------------------------------------
# Fused kernel: corruption chain -> padded MLP, one tile of TILE_N rows per
# grid step, everything resident in VMEM (only plain jnp ops -> lowers both on
# Mosaic-TPU and in interpret mode).
# ---------------------------------------------------------------------------
def _fused_kernel(x_ref, noise_ref, w1_ref, b1_ref, w2_ref, b2_ref, logits_ref,
                  *, sigma, bright, contrast):
    x = x_ref[...]                                     # f32 [tile_n, 768]
    noise = noise_ref[...].astype(jnp.float32)         # bf16 -> f32

    # --- corruption chain (VPU/XLU work, never leaves VMEM) ---
    x = _augment(x, noise, sigma, bright, contrast)

    # --- wrapped model: Linear(768->128pad) -> ReLU -> Linear(128pad->128pad) ---
    h = jnp.dot(x.astype(jnp.bfloat16), w1_ref[...],
                preferred_element_type=jnp.float32)
    h = jnp.maximum(h + b1_ref[...], 0.0)
    logits_ref[...] = jnp.dot(h.astype(jnp.bfloat16), w2_ref[...],
                              preferred_element_type=jnp.float32) + b2_ref[...]


# ---------------------------------------------------------------------------
# DataAugmentedModel.forward: augment -> model (single fused pallas_call).
# `noise` is a standard-normal array, shape [N, C*H*W] (torch.randn analog).
# ---------------------------------------------------------------------------
def data_augmented_model_forward(x_nchw, noise, params,
                                 dataset_name="toy_dataset",
                                 severity=SEVERITY,
                                 tile_n=512):
    cfg = FIXED_CONFIG[dataset_name]
    (sigma,) = cfg["gaussian_noise"][severity - 1]
    (bright,) = cfg["brightness"][severity - 1]
    (contrast,) = cfg["contrast"][severity - 1]
    assert bright >= 0.0, "fused gaussian+brightness clip assumes bright >= 0"

    n, c, h, w = x_nchw.shape
    d = c * h * w
    x = x_nchw.reshape(n, d)                              # lane-dense [N, 768]
    noise = noise.reshape(n, d).astype(jnp.bfloat16)      # half the HBM bytes

    w1, b1, w2, b2 = params
    hidden, n_cls = w1.shape[1], w2.shape[1]
    hp = _round_up(hidden, 128)                           # 32  -> 128
    cp = _round_up(n_cls, 128)                            # 10  -> 128
    w1p = jnp.pad(w1, ((0, 0), (0, hp - hidden))).astype(jnp.bfloat16)
    b1p = jnp.pad(b1, ((0, 0), (0, hp - hidden))).astype(jnp.float32)
    w2p = jnp.pad(w2, ((0, hp - hidden), (0, cp - n_cls))).astype(jnp.bfloat16)
    b2p = jnp.pad(b2, ((0, 0), (0, cp - n_cls))).astype(jnp.float32)

    # Batch tiling: multiple of 8 sublanes; keep >= 2 tiles when the batch
    # allows so both v7x TensorCores receive work under the "parallel" axis.
    rows = _round_up(n, 8)
    tile_n = max(8, min(_round_up(tile_n, 8), rows))
    if rows > 8:
        tile_n = min(tile_n, _round_up(-(-rows // 2), 8))
    n_pad = _round_up(n, tile_n)
    if n_pad != n:
        x = jnp.pad(x, ((0, n_pad - n), (0, 0)))
        noise = jnp.pad(noise, ((0, n_pad - n), (0, 0)))
    grid = (n_pad // tile_n,)

    kernel = partial(_fused_kernel, sigma=sigma, bright=bright,
                     contrast=contrast)

    logits_pad = pl.pallas_call(
        kernel,
        out_shape=jax.ShapeDtypeStruct((n_pad, cp), jnp.float32),
        grid_spec=pltpu.PrefetchScalarGridSpec(
            num_scalar_prefetch=0,
            grid=grid,
            in_specs=[
                pl.BlockSpec((tile_n, d), lambda i: (i, 0)),   # x tile
                pl.BlockSpec((tile_n, d), lambda i: (i, 0)),   # noise tile
                pl.BlockSpec((d, hp),     lambda i: (0, 0)),   # w1 (resident)
                pl.BlockSpec((1, hp),     lambda i: (0, 0)),   # b1
                pl.BlockSpec((hp, cp),    lambda i: (0, 0)),   # w2
                pl.BlockSpec((1, cp),     lambda i: (0, 0)),   # b2
            ],
            out_specs=pl.BlockSpec((tile_n, cp), lambda i: (i, 0)),
        ),
        compiler_params=pltpu.CompilerParams(
            dimension_semantics=("parallel",)),
    )(x, noise, w1p, b1p, w2p, b2p)

    return logits_pad[:n, :n_cls]


# ---------------------------------------------------------------------------
# Pure-JAX reference (same noise, same dtype choices as the kernel).
# ---------------------------------------------------------------------------
def reference_forward(x_nchw, noise, params, dataset_name="toy_dataset",
                      severity=SEVERITY):
    cfg = FIXED_CONFIG[dataset_name]
    (sigma,) = cfg["gaussian_noise"][severity - 1]
    (bright,) = cfg["brightness"][severity - 1]
    (contrast,) = cfg["contrast"][severity - 1]
    n = x_nchw.shape[0]
    x = x_nchw.reshape(n, -1)
    noise = noise.reshape(n, -1).astype(jnp.bfloat16).astype(jnp.float32)
    x = _augment(x, noise, sigma, bright, contrast)
    w1, b1, w2, b2 = params
    h = jnp.dot(x.astype(jnp.bfloat16), w1.astype(jnp.bfloat16),
                preferred_element_type=jnp.float32)
    h = jnp.maximum(h + b1, 0.0)
    return jnp.dot(h.astype(jnp.bfloat16), w2.astype(jnp.bfloat16),
                   preferred_element_type=jnp.float32) + b2


if __name__ == "__main__":
    N, C, H, W = 2, 3, 16, 16
    D = C * H * W          # 768 = 6 * 128 (lane-dense feature width)
    HIDDEN = 32
    NUM_CLASSES = 10

    key = jax.random.PRNGKey(0)
    k_x, k_n, k_w1, k_w2 = jax.random.split(key, 4)

    # Input image batch in [0, 1], NCHW like PyTorch.
    x = jax.random.uniform(k_x, (N, C, H, W), dtype=jnp.float32)
    # torch.randn analog for the gaussian_noise corruption (deterministic).
    noise = jax.random.normal(k_n, (N, D), dtype=jnp.bfloat16)

    # Deterministic model parameters (synthetic "self.model").
    w1 = jax.random.normal(k_w1, (D, HIDDEN), dtype=jnp.float32) / jnp.sqrt(float(D))
    b1 = jnp.zeros((1, HIDDEN), dtype=jnp.float32)
    w2 = (jax.random.normal(k_w2, (HIDDEN, NUM_CLASSES), dtype=jnp.float32)
          / jnp.sqrt(float(HIDDEN)))
    b2 = jnp.zeros((1, NUM_CLASSES), dtype=jnp.float32)
    params = (w1, b1, w2, b2)

    out = data_augmented_model_forward(x, noise, params)
    out = jax.block_until_ready(out)
    assert out.shape == (N, NUM_CLASSES)
    assert bool(jnp.all(jnp.isfinite(out)))

    ref = reference_forward(x, noise, params)
    assert jnp.allclose(out, ref, atol=5e-3, rtol=5e-3), "mismatch vs reference"

    print("KERNEL_OK")
</pallas_src>

<mosaic_0001>
module attributes {stable_mosaic.version = 11 : i64} {
  func.func @_fused_kernel(%arg0: i32, %arg1: memref<8x768xf32, #tpu.memory_space<vmem>>, %arg2: memref<8x768xbf16, #tpu.memory_space<vmem>>, %arg3: memref<768x128xbf16, #tpu.memory_space<vmem>>, %arg4: memref<1x128xf32, #tpu.memory_space<vmem>>, %arg5: memref<128x128xbf16, #tpu.memory_space<vmem>>, %arg6: memref<1x128xf32, #tpu.memory_space<vmem>>, %arg7: memref<8x128xf32, #tpu.memory_space<vmem>>) attributes {dimension_semantics = [#tpu.dimension_semantics<parallel>], iteration_bounds = array<i64: 1>, scalar_prefetch = 0 : i64, scratch_operands = 0 : i64, tpu.core_type = #tpu.core_type<tc>, window_params = [{transform_indices = @transform_0, window_bounds = array<i64: 8, 768>}, {transform_indices = @transform_1, window_bounds = array<i64: 8, 768>}, {pipeline_mode = #tpu.pipeline_mode<synchronous>, transform_indices = @transform_2, window_bounds = array<i64: 768, 128>}, {pipeline_mode = #tpu.pipeline_mode<synchronous>, transform_indices = @transform_3, window_bounds = array<i64: 1, 128>}, {pipeline_mode = #tpu.pipeline_mode<synchronous>, transform_indices = @transform_4, window_bounds = array<i64: 128, 128>}, {pipeline_mode = #tpu.pipeline_mode<synchronous>, transform_indices = @transform_5, window_bounds = array<i64: 1, 128>}, {transform_indices = @transform_6, window_bounds = array<i64: 8, 128>}]} {
    %c0 = arith.constant 0 : index
    %c0_0 = arith.constant 0 : index
    %0 = vector.load %arg1[%c0, %c0_0] : memref<8x768xf32, #tpu.memory_space<vmem>>, vector<8x768xf32>
    %c0_1 = arith.constant 0 : index
    %c0_2 = arith.constant 0 : index
    %1 = vector.load %arg2[%c0_1, %c0_2] : memref<8x768xbf16, #tpu.memory_space<vmem>>, vector<8x768xbf16>
    %2 = arith.extf %1 : vector<8x768xbf16> to vector<8x768xf32>
    %cst = arith.constant 8.000000e-02 : f32
    %3 = vector.broadcast %cst : f32 to vector<8x768xf32>
    %4 = arith.mulf %3, %2 : vector<8x768xf32>
    %5 = arith.addf %0, %4 : vector<8x768xf32>
    %cst_3 = arith.constant 1.500000e-01 : f32
    %6 = vector.broadcast %cst_3 : f32 to vector<8x768xf32>
    %7 = arith.addf %5, %6 : vector<8x768xf32>
    %cst_4 = arith.constant 1.500000e-01 : f32
    %cst_5 = arith.constant 1.000000e+00 : f32
    %8 = vector.broadcast %cst_4 : f32 to vector<8x768xf32>
    %9 = arith.maximumf %8, %7 : vector<8x768xf32>
    %10 = vector.broadcast %cst_5 : f32 to vector<8x768xf32>
    %11 = arith.minimumf %10, %9 : vector<8x768xf32>
    %cst_6 = arith.constant dense<0.000000e+00> : vector<8xf32>
    %12 = vector.multi_reduction <add>, %11, %cst_6 [1] : vector<8x768xf32> to vector<8xf32>
    %13 = vector.shape_cast %12 : vector<8xf32> to vector<8x1xf32>
    %cst_7 = arith.constant 7.680000e+02 : f32
    %14 = vector.broadcast %cst_7 : f32 to vector<8x1xf32>
    %15 = arith.divf %13, %14 : vector<8x1xf32>
    %cst_8 = arith.constant 6.000000e-01 : f32
    %16 = vector.broadcast %cst_8 : f32 to vector<8x768xf32>
    %17 = arith.mulf %11, %16 : vector<8x768xf32>
    %cst_9 = arith.constant 4.000000e-01 : f32
    %18 = vector.broadcast %cst_9 : f32 to vector<8x1xf32>
    %19 = arith.mulf %15, %18 : vector<8x1xf32>
    %20 = vector.broadcast %19 : vector<8x1xf32> to vector<8x768xf32>
    %21 = arith.addf %17, %20 : vector<8x768xf32>
    %cst_10 = arith.constant 0.000000e+00 : f32
    %cst_11 = arith.constant 1.000000e+00 : f32
    %22 = vector.broadcast %cst_10 : f32 to vector<8x768xf32>
    %23 = arith.maximumf %22, %21 : vector<8x768xf32>
    %24 = vector.broadcast %cst_11 : f32 to vector<8x768xf32>
    %25 = arith.minimumf %24, %23 : vector<8x768xf32>
    %26 = arith.truncf %25 : vector<8x768xf32> to vector<8x768xbf16>
    %c0_12 = arith.constant 0 : index
    %c0_13 = arith.constant 0 : index
    %27 = vector.load %arg3[%c0_12, %c0_13] : memref<768x128xbf16, #tpu.memory_space<vmem>>, vector<768x128xbf16>
    %cst_14 = arith.constant dense<0.000000e+00> : vector<8x128xf32>
    %28 = tpu.matmul %26, %27, %cst_14 {dimension_numbers = #tpu.dot_dimension_numbers<[1], [0], [0], [1], [0, 0, 1, 1], [], []>} : vector<8x768xbf16>, vector<768x128xbf16>, vector<8x128xf32> -> vector<8x128xf32>
    %c0_15 = arith.constant 0 : index
    %c0_16 = arith.constant 0 : index
    %29 = vector.load %arg4[%c0_15, %c0_16] : memref<1x128xf32, #tpu.memory_space<vmem>>, vector<1x128xf32>
    %30 = vector.broadcast %29 : vector<1x128xf32> to vector<8x128xf32>
    %31 = arith.addf %28, %30 : vector<8x128xf32>
    %cst_17 = arith.constant 0.000000e+00 : f32
    %32 = vector.broadcast %cst_17 : f32 to vector<8x128xf32>
    %33 = arith.maximumf %31, %32 : vector<8x128xf32>
    %34 = arith.truncf %33 : vector<8x128xf32> to vector<8x128xbf16>
    %c0_18 = arith.constant 0 : index
    %c0_19 = arith.constant 0 : index
    %35 = vector.load %arg5[%c0_18, %c0_19] : memref<128x128xbf16, #tpu.memory_space<vmem>>, vector<128x128xbf16>
    %cst_20 = arith.constant dense<0.000000e+00> : vector<8x128xf32>
    %36 = tpu.matmul %34, %35, %cst_20 {dimension_numbers = #tpu.dot_dimension_numbers<[1], [0], [0], [1], [0, 0, 1, 1], [], []>} : vector<8x128xbf16>, vector<128x128xbf16>, vector<8x128xf32> -> vector<8x128xf32>
    %c0_21 = arith.constant 0 : index
    %c0_22 = arith.constant 0 : index
    %37 = vector.load %arg6[%c0_21, %c0_22] : memref<1x128xf32, #tpu.memory_space<vmem>>, vector<1x128xf32>
    %38 = vector.broadcast %37 : vector<1x128xf32> to vector<8x128xf32>
    %39 = arith.addf %36, %38 : vector<8x128xf32>
    %c0_23 = arith.constant 0 : index
    %c0_24 = arith.constant 0 : index
    %40 = vector.load %arg7[%c0_23, %c0_24] : memref<8x128xf32, #tpu.memory_space<vmem>>, vector<8x128xf32>
    tpu.vector_store %arg7[%c0_23, %c0_24], %39 {strides = array<i32>} : memref<8x128xf32, #tpu.memory_space<vmem>>, vector<8x128xf32>,
    return
  }
  func.func @transform_0(%arg0: i32) -> (i32, i32) {
    %c0_i32 = arith.constant 0 : i32
    %c0_i32_0 = arith.constant 0 : i32
    return %arg0, %c0_i32 : i32, i32
  }
  func.func @transform_1(%arg0: i32) -> (i32, i32) {
    %c0_i32 = arith.constant 0 : i32
    %c0_i32_0 = arith.constant 0 : i32
    return %arg0, %c0_i32 : i32, i32
  }
  func.func @transform_2(%arg0: i32) -> (i32, i32) {
    %c0_i32 = arith.constant 0 : i32
    %c0_i32_0 = arith.constant 0 : i32
    %c0_i32_1 = arith.constant 0 : i32
    return %c0_i32, %c0_i32_0 : i32, i32
  }
  func.func @transform_3(%arg0: i32) -> (i32, i32) {
    %c0_i32 = arith.constant 0 : i32
    %c0_i32_0 = arith.constant 0 : i32
    %c0_i32_1 = arith.constant 0 : i32
    return %c0_i32, %c0_i32_0 : i32, i32
  }
  func.func @transform_4(%arg0: i32) -> (i32, i32) {
    %c0_i32 = arith.constant 0 : i32
    %c0_i32_0 = arith.constant 0 : i32
    %c0_i32_1 = arith.constant 0 : i32
    return %c0_i32, %c0_i32_0 : i32, i32
  }
  func.func @transform_5(%arg0: i32) -> (i32, i32) {
    %c0_i32 = arith.constant 0 : i32
    %c0_i32_0 = arith.constant 0 : i32
    %c0_i32_1 = arith.constant 0 : i32
    return %c0_i32, %c0_i32_0 : i32, i32
  }
  func.func @transform_6(%arg0: i32) -> (i32, i32) {
    %c0_i32 = arith.constant 0 : i32
    %c0_i32_0 = arith.constant 0 : i32
    return %arg0, %c0_i32 : i32, i32
  }
}

</mosaic_0001>

<llo_original>
// kernel: tpu_custom_call.1
$region0: #{tpu_custom_call.1}
  #allocation0 [shape = 'u32[]', space=smem, size = 0x4, offset = 0x4, fixed_abs, tag = 'smem constant byte address 0x4 - core index']
  #allocation1 [shape = 'u32[144,128]{1,0:T(1,128)}', space=vmem, size = 0x12000, scoped, tag = 'internal scratch']
  %s0 = inlined_call_operand.hbm [shape: f32[8,768], index: 0, kind: input, shape index: {}]
  %s1 = inlined_call_operand.hbm [shape: bf16[8,768], index: 1, kind: input, shape index: {}]
  %s2 = inlined_call_operand.hbm [shape: bf16[768,128], index: 2, kind: input, shape index: {}]
  %s3 = inlined_call_operand.vmem [shape: f32[1,128], index: 3, kind: input, shape index: {}]
  %s4 = inlined_call_operand.hbm [shape: bf16[128,128], index: 4, kind: input, shape index: {}]
  %s5 = inlined_call_operand.vmem [shape: f32[1,128], index: 5, kind: input, shape index: {}]
  %s6 = inlined_call_operand.hbm [shape: f32[8,128], index: 6, kind: output, shape index: {}]
  %s7 = sld [smem:[#allocation0]]
  $region50: #{tpu_custom_call.1} parent=0
    _
  %s9 = ssub.s32 1, %s7
  %s10 = scalar_select 0, %s9, %s7
  $region1: #{tpu_custom_call.1} parent=0
    #allocation2 [shape = 'u8[24576]{0}', space=vmem, size = 0x6000, scoped, tag = 'input window, operand 0, single buffered']
    #allocation3 [shape = 's32[1]{0}', space=sflag, size = 0x4, scoped, tag = 'scoped memory for tpu_custom_call.1']
    #allocation4 [shape = 's32[1]{0}', space=sflag, size = 0x4, scoped, tag = 'scoped memory for tpu_custom_call.1']
    #allocation5 [shape = 'u8[12288]{0}', space=vmem, size = 0x3000, scoped, tag = 'input window, operand 1, single buffered']
    #allocation6 [shape = 's32[1]{0}', space=sflag, size = 0x4, scoped, tag = 'scoped memory for tpu_custom_call.1']
    #allocation7 [shape = 'u8[196608]{0}', space=vmem, size = 0x30000, scoped, tag = 'input window, operand 2, single buffered']
    #allocation8 [shape = 'u8[32768]{0}', space=vmem, size = 0x8000, scoped, tag = 'input window, operand 4, single buffered']
    #allocation9 [shape = 's32[1]{0}', space=sflag, size = 0x4, scoped, tag = 'scoped memory for tpu_custom_call.1']
    #allocation10 [shape = 'u8[4096]{0}', space=vmem, size = 0x1000, scoped, tag = 'output window, operand 0, single buffered']
    %11 = vsyncpa [#allocation3], 0
    %12 = vsyncpa [#allocation6], 0
    %13 = vsyncpa [#allocation9], 0
    %14 = vsyncpa [#allocation4], 0
    // Predicated region
    $region2: #{tpu_custom_call.1} parent=1 // pred_check
      _
    $region3: #{tpu_custom_call.1} parent=1 // pred_check_branch
      %16 = sbr.rel (0) target = $region5
    $region4: #{tpu_custom_call.1} parent=1 // pred_region
      %s18 = ssub.s32 768, 768
      %19 = vsyncadd [#allocation3], %s18
      %s21 = sshll.u32 [#allocation2], 4
      %s22 = int_to_ptr.vmem [resolvable:$true] %s21
      %24 = dma.hbm_to_vmem [thread:$0]  %s0, 768, %s22, [#allocation3]
    $region5: #{tpu_custom_call.1} parent=1 // pred_fallthru
      _
    // Predicated region
    $region6: #{tpu_custom_call.1} parent=1 // pred_check
      _
    $region7: #{tpu_custom_call.1} parent=1 // pred_check_branch
      %26 = sbr.rel (0) target = $region9
    $region8: #{tpu_custom_call.1} parent=1 // pred_region
      %s28 = ssub.s32 384, 384
      %29 = vsyncadd [#allocation6], %s28
      %s31 = sshll.u32 [#allocation5], 4
      %s32 = int_to_ptr.vmem [resolvable:$true] %s31
      %34 = dma.hbm_to_vmem [thread:$0]  %s1, 384, %s32, [#allocation6]
    $region9: #{tpu_custom_call.1} parent=1 // pred_fallthru
      _
    // Predicated region
    $region10: #{tpu_custom_call.1} parent=1 // pred_check
      _
    $region11: #{tpu_custom_call.1} parent=1 // pred_check_branch
      %36 = sbr.rel (0) target = $region13
    $region12: #{tpu_custom_call.1} parent=1 // pred_region
      %s38 = ssub.s32 6144, 6144
      %39 = vsyncadd [#allocation6], %s38
      %s40 = sshll.u32 [#allocation7], 4
      %s41 = int_to_ptr.vmem [resolvable:$true] %s40
      %46 = dma.hbm_to_vmem [thread:$0]  %s2, 6144, %s41, [#allocation6], 64, 64, 4
    $region13: #{tpu_custom_call.1} parent=1 // pred_fallthru
      _
    // Predicated region
    $region14: #{tpu_custom_call.1} parent=1 // pred_check
      _
    $region15: #{tpu_custom_call.1} parent=1 // pred_check_branch
      %48 = sbr.rel (0) target = $region17
    $region16: #{tpu_custom_call.1} parent=1 // pred_region
      _
    $region17: #{tpu_custom_call.1} parent=1 // pred_fallthru
      _
    // Predicated region
    $region18: #{tpu_custom_call.1} parent=1 // pred_check
      _
    $region19: #{tpu_custom_call.1} parent=1 // pred_check_branch
      %50 = sbr.rel (0) target = $region21
    $region20: #{tpu_custom_call.1} parent=1 // pred_region
      %s52 = ssub.s32 1024, 1024
      %53 = vsyncadd [#allocation9], %s52
      %s54 = sshll.u32 [#allocation8], 4
      %s55 = int_to_ptr.vmem [resolvable:$true] %s54
      %60 = dma.hbm_to_vmem [thread:$0]  %s4, 1024, %s55, [#allocation9], 64, 64, 4
    $region21: #{tpu_custom_call.1} parent=1 // pred_fallthru
      _
    // Predicated region
    $region22: #{tpu_custom_call.1} parent=1 // pred_check
      _
    $region23: #{tpu_custom_call.1} parent=1 // pred_check_branch
      %62 = sbr.rel (0) target = $region25
    $region24: #{tpu_custom_call.1} parent=1 // pred_region
      _
    $region25: #{tpu_custom_call.1} parent=1 // pred_fallthru
      _
    // Predicated region
    $region26: #{tpu_custom_call.1} parent=1 // pred_check
      _
    $region27: #{tpu_custom_call.1} parent=1 // pred_check_branch
      %64 = sbr.rel (0) target = $region29
    $region28: #{tpu_custom_call.1} parent=1 // pred_region
      %65 = dma.done [#allocation3], 768
    $region29: #{tpu_custom_call.1} parent=1 // pred_fallthru
      _
    // Predicated region
    $region30: #{tpu_custom_call.1} parent=1 // pred_check
      _
    $region31: #{tpu_custom_call.1} parent=1 // pred_check_branch
      %67 = sbr.rel (0) target = $region33
    $region32: #{tpu_custom_call.1} parent=1 // pred_region
      %68 = dma.done [#allocation6], 384
    $region33: #{tpu_custom_call.1} parent=1 // pred_fallthru
      _
    // Predicated region
    $region34: #{tpu_custom_call.1} parent=1 // pred_check
      _
    $region35: #{tpu_custom_call.1} parent=1 // pred_check_branch
      %70 = sbr.rel (0) target = $region37
    $region36: #{tpu_custom_call.1} parent=1 // pred_region
      %71 = dma.done [#allocation6], 6144
    $region37: #{tpu_custom_call.1} parent=1 // pred_fallthru
      _
    // Predicated region
    $region38: #{tpu_custom_call.1} parent=1 // pred_check
      _
    $region39: #{tpu_custom_call.1} parent=1 // pred_check_branch
      %73 = sbr.rel (0) target = $region41
    $region40: #{tpu_custom_call.1} parent=1 // pred_region
      %74 = dma.done [#allocation9], 1024
    $region41: #{tpu_custom_call.1} parent=1 // pred_fallthru
      _
    %v76 = vld [vmem:[#allocation2] sm:$0xff]
    %v77 = vld [vmem:[#allocation2 + $0x8] sm:$0xff]
    %v78 = vld [vmem:[#allocation2 + $0x10] sm:$0xff]
    %v79 = vld [vmem:[#allocation2 + $0x18] sm:$0xff]
    %v80 = vld [vmem:[#allocation2 + $0x20] sm:$0xff]
    %v81 = vld [vmem:[#allocation2 + $0x28] sm:$0xff]
    %v82 = vld [vmem:[#allocation5] sm:$0xff]
    %v83 = vld [vmem:[#allocation5 + $0x8] sm:$0xff]
    %v84 = vld [vmem:[#allocation5 + $0x10] sm:$0xff]
    %v85 = vunpack.c.l.bf16 %v82
    %v86 = vunpack.c.h.bf16 %v82
    %v87 = vunpack.c.l.bf16 %v83
    %v88 = vunpack.c.h.bf16 %v83
    %v89 = vunpack.c.l.bf16 %v84
    %v90 = vunpack.c.h.bf16 %v84
    %v91 = vmul.f32 %v85, 0.08
    %v92 = vmul.f32 %v86, 0.08
    %v93 = vmul.f32 %v87, 0.08
    %v94 = vmul.f32 %v88, 0.08
    %v95 = vmul.f32 %v89, 0.08
    %v96 = vmul.f32 %v90, 0.08
    %v97 = vadd.f32 %v76, %v91
    %v98 = vadd.f32 %v77, %v92
    %v99 = vadd.f32 %v78, %v93
    %v100 = vadd.f32 %v79, %v94
    %v101 = vadd.f32 %v80, %v95
    %v102 = vadd.f32 %v81, %v96
    %v103 = vadd.f32 %v97, 0.15
    %v104 = vadd.f32 %v98, 0.15
    %v105 = vadd.f32 %v99, 0.15
    %v106 = vadd.f32 %v100, 0.15
    %v107 = vadd.f32 %v101, 0.15
    %v108 = vadd.f32 %v102, 0.15
    %v109 = vmax.f32 %v103, 0.15
    %v110 = vmax.f32 %v104, 0.15
    %v111 = vmax.f32 %v105, 0.15
    %v112 = vmax.f32 %v106, 0.15
    %v113 = vmax.f32 %v107, 0.15
    %v114 = vmax.f32 %v108, 0.15
    %v115 = vmin.f32 %v109, 1.0
    %v116 = vmin.f32 %v110, 1.0
    %v117 = vmin.f32 %v111, 1.0
    %v118 = vmin.f32 %v112, 1.0
    %v119 = vmin.f32 %v113, 1.0
    %v120 = vmin.f32 %v114, 1.0
    %v121 = vadd.f32 %v115, %v116
    %v122 = vadd.f32 %v121, %v117
    %v123 = vadd.f32 %v122, %v118
    %v124 = vadd.f32 %v123, %v119
    %v125 = vadd.f32 %v124, %v120
    %126 = vadd.xlane.f32.xlu0 %v125
    %v127 = vpop.xlane.xlu0 %126
    %v128 = vrcp.pop 768.0
    %v129 = vmul.f32 %v127, %v128
    %v130 = vmul.f32 %v115, 0.6
    %v131 = vmul.f32 %v116, 0.6
    %v132 = vmul.f32 %v117, 0.6
    %v133 = vmul.f32 %v118, 0.6
    %v134 = vmul.f32 %v119, 0.6
    %v135 = vmul.f32 %v120, 0.6
    %v136 = vmul.f32 %v129, 0.4
    %v137 = vadd.f32 %v130, %v136
    %v138 = vadd.f32 %v131, %v136
    %v139 = vadd.f32 %v132, %v136
    %v140 = vadd.f32 %v133, %v136
    %v141 = vadd.f32 %v134, %v136
    %v142 = vadd.f32 %v135, %v136
    %v143 = vmax.f32 %v137, 0.0
    %v144 = vmax.f32 %v138, 0.0
    %v145 = vmax.f32 %v139, 0.0
    %v146 = vmax.f32 %v140, 0.0
    %v147 = vmax.f32 %v141, 0.0
    %v148 = vmax.f32 %v142, 0.0
    %v149 = vmin.f32 %v143, 1.0
    %v150 = vmin.f32 %v144, 1.0
    %v151 = vmin.f32 %v145, 1.0
    %v152 = vmin.f32 %v146, 1.0
    %v153 = vmin.f32 %v147, 1.0
    %v154 = vmin.f32 %v148, 1.0
    %v155 = vpack.c.bf16 %v149, %v149
    %v156 = vpack.c.bf16 %v150, %v150
    %v157 = vpack.c.bf16 %v151, %v151
    %v158 = vpack.c.bf16 %v152, %v152
    %v159 = vpack.c.bf16 %v153, %v153
    %v160 = vpack.c.bf16 %v154, %v154
    %v161 = vld [vmem:[#allocation7] sm:$0xf]
    %v162 = vld [vmem:[#allocation7 + $0x4] sm:$0xf]
    %v163 = vld [vmem:[#allocation7 + $0x8] sm:$0xf]
    %v164 = vld [vmem:[#allocation7 + $0xc] sm:$0xf]
    %v165 = vld [vmem:[#allocation7 + $0x10] sm:$0xf]
    %v166 = vld [vmem:[#allocation7 + $0x14] sm:$0xf]
    %v167 = vld [vmem:[#allocation7 + $0x18] sm:$0xf]
    %v168 = vld [vmem:[#allocation7 + $0x1c] sm:$0xf]
    %v169 = vld [vmem:[#allocation7 + $0x20] sm:$0xf]
    %v170 = vld [vmem:[#allocation7 + $0x24] sm:$0xf]
    %v171 = vld [vmem:[#allocation7 + $0x28] sm:$0xf]
    %v172 = vld [vmem:[#allocation7 + $0x2c] sm:$0xf]
    %v173 = vld [vmem:[#allocation7 + $0x30] sm:$0xf]
    %v174 = vld [vmem:[#allocation7 + $0x34] sm:$0xf]
    %v175 = vld [vmem:[#allocation7 + $0x38] sm:$0xf]
    %v176 = vld [vmem:[#allocation7 + $0x3c] sm:$0xf]
    %v177 = vld [vmem:[#allocation7 + $0x40] sm:$0xf]
    %v178 = vld [vmem:[#allocation7 + $0x44] sm:$0xf]
    %v179 = vld [vmem:[#allocation7 + $0x48] sm:$0xf]
    %v180 = vld [vmem:[#allocation7 + $0x4c] sm:$0xf]
    %v181 = vld [vmem:[#allocation7 + $0x50] sm:$0xf]
    %v182 = vld [vmem:[#allocation7 + $0x54] sm:$0xf]
    %v183 = vld [vmem:[#allocation7 + $0x58] sm:$0xf]
    %v184 = vld [vmem:[#allocation7 + $0x5c] sm:$0xf]
    %v185 = vld [vmem:[#allocation7 + $0x60] sm:$0xf]
    %v186 = vld [vmem:[#allocation7 + $0x64] sm:$0xf]
    %v187 = vld [vmem:[#allocation7 + $0x68] sm:$0xf]
    %v188 = vld [vmem:[#allocation7 + $0x6c] sm:$0xf]
    %v189 = vld [vmem:[#allocation7 + $0x70] sm:$0xf]
    %v190 = vld [vmem:[#allocation7 + $0x74] sm:$0xf]
    %v191 = vld [vmem:[#allocation7 + $0x78] sm:$0xf]
    %v192 = vld [vmem:[#allocation7 + $0x7c] sm:$0xf]
    %v193 = vld [vmem:[#allocation7 + $0x80] sm:$0xf]
    %v194 = vld [vmem:[#allocation7 + $0x84] sm:$0xf]
    %v195 = vld [vmem:[#allocation7 + $0x88] sm:$0xf]
    %v196 = vld [vmem:[#allocation7 + $0x8c] sm:$0xf]
    %v197 = vld [vmem:[#allocation7 + $0x90] sm:$0xf]
    %v198 = vld [vmem:[#allocation7 + $0x94] sm:$0xf]
    %v199 = vld [vmem:[#allocation7 + $0x98] sm:$0xf]
    %v200 = vld [vmem:[#allocation7 + $0x9c] sm:$0xf]
    %v201 = vld [vmem:[#allocation7 + $0xa0] sm:$0xf]
    %v202 = vld [vmem:[#allocation7 + $0xa4] sm:$0xf]
    %v203 = vld [vmem:[#allocation7 + $0xa8] sm:$0xf]
    %v204 = vld [vmem:[#allocation7 + $0xac] sm:$0xf]
    %v205 = vld [vmem:[#allocation7 + $0xb0] sm:$0xf]
    %v206 = vld [vmem:[#allocation7 + $0xb4] sm:$0xf]
    %v207 = vld [vmem:[#allocation7 + $0xb8] sm:$0xf]
    %v208 = vld [vmem:[#allocation7 + $0xbc] sm:$0xf]
    %v209 = vld [vmem:[#allocation7 + $0xc0] sm:$0xf]
    %v210 = vld [vmem:[#allocation7 + $0xc4] sm:$0xf]
    %v211 = vld [vmem:[#allocation7 + $0xc8] sm:$0xf]
    %v212 = vld [vmem:[#allocation7 + $0xcc] sm:$0xf]
    %v213 = vld [vmem:[#allocation7 + $0xd0] sm:$0xf]
    %v214 = vld [vmem:[#allocation7 + $0xd4] sm:$0xf]
    %v215 = vld [vmem:[#allocation7 + $0xd8] sm:$0xf]
    %v216 = vld [vmem:[#allocation7 + $0xdc] sm:$0xf]
    %v217 = vld [vmem:[#allocation7 + $0xe0] sm:$0xf]
    %v218 = vld [vmem:[#allocation7 + $0xe4] sm:$0xf]
    %v219 = vld [vmem:[#allocation7 + $0xe8] sm:$0xf]
    %v220 = vld [vmem:[#allocation7 + $0xec] sm:$0xf]
    %v221 = vld [vmem:[#allocation7 + $0xf0] sm:$0xf]
    %v222 = vld [vmem:[#allocation7 + $0xf4] sm:$0xf]
    %v223 = vld [vmem:[#allocation7 + $0xf8] sm:$0xf]
    %v224 = vld [vmem:[#allocation7 + $0xfc] sm:$0xf]
    %v225 = vld [vmem:[#allocation7 + $0x100] sm:$0xf]
    %v226 = vld [vmem:[#allocation7 + $0x104] sm:$0xf]
    %v227 = vld [vmem:[#allocation7 + $0x108] sm:$0xf]
    %v228 = vld [vmem:[#allocation7 + $0x10c] sm:$0xf]
    %v229 = vld [vmem:[#allocation7 + $0x110] sm:$0xf]
    %v230 = vld [vmem:[#allocation7 + $0x114] sm:$0xf]
    %v231 = vld [vmem:[#allocation7 + $0x118] sm:$0xf]
    %v232 = vld [vmem:[#allocation7 + $0x11c] sm:$0xf]
    %v233 = vld [vmem:[#allocation7 + $0x120] sm:$0xf]
    %v234 = vld [vmem:[#allocation7 + $0x124] sm:$0xf]
    %v235 = vld [vmem:[#allocation7 + $0x128] sm:$0xf]
    %v236 = vld [vmem:[#allocation7 + $0x12c] sm:$0xf]
    %v237 = vld [vmem:[#allocation7 + $0x130] sm:$0xf]
    %v238 = vld [vmem:[#allocation7 + $0x134] sm:$0xf]
    %v239 = vld [vmem:[#allocation7 + $0x138] sm:$0xf]
    %v240 = vld [vmem:[#allocation7 + $0x13c] sm:$0xf]
    %v241 = vld [vmem:[#allocation7 + $0x140] sm:$0xf]
    %v242 = vld [vmem:[#allocation7 + $0x144] sm:$0xf]
    %v243 = vld [vmem:[#allocation7 + $0x148] sm:$0xf]
    %v244 = vld [vmem:[#allocation7 + $0x14c] sm:$0xf]
    %v245 = vld [vmem:[#allocation7 + $0x150] sm:$0xf]
    %v246 = vld [vmem:[#allocation7 + $0x154] sm:$0xf]
    %v247 = vld [vmem:[#allocation7 + $0x158] sm:$0xf]
    %v248 = vld [vmem:[#allocation7 + $0x15c] sm:$0xf]
    %v249 = vld [vmem:[#allocation7 + $0x160] sm:$0xf]
    %v250 = vld [vmem:[#allocation7 + $0x164] sm:$0xf]
    %v251 = vld [vmem:[#allocation7 + $0x168] sm:$0xf]
    %v252 = vld [vmem:[#allocation7 + $0x16c] sm:$0xf]
    %v253 = vld [vmem:[#allocation7 + $0x170] sm:$0xf]
    %v254 = vld [vmem:[#allocation7 + $0x174] sm:$0xf]
    %v255 = vld [vmem:[#allocation7 + $0x178] sm:$0xf]
    %v256 = vld [vmem:[#allocation7 + $0x17c] sm:$0xf]
    %v257 = vld [vmem:[%s3] sm:$0x1]
    %v259 = vlaneseq
    %v260 = vshrl.u32 %v259, 7
    %v261 = vsub.s32 0, %v260
    %v262 = vrot.slane %v257, %v261
    %v360 = vunpack.c.l.b16 %v161
    %v361 = vunpack.c.l.b16 %v162
    %v362 = vunpack.c.l.b16 %v163
    %v363 = vunpack.c.l.b16 %v164
    %v364 = vunpack.c.l.b16 %v165
    %v365 = vunpack.c.l.b16 %v166
    %v366 = vunpack.c.l.b16 %v167
    %v367 = vunpack.c.l.b16 %v168
    %v368 = vunpack.c.l.b16 %v169
    %v369 = vunpack.c.l.b16 %v170
    %v370 = vunpack.c.l.b16 %v171
    %v371 = vunpack.c.l.b16 %v172
    %v372 = vunpack.c.l.b16 %v173
    %v373 = vunpack.c.l.b16 %v174
    %v374 = vunpack.c.l.b16 %v175
    %v375 = vunpack.c.l.b16 %v176
    %v376 = vunpack.c.l.b16 %v177
    %v377 = vunpack.c.l.b16 %v178
    %v378 = vunpack.c.l.b16 %v179
    %v379 = vunpack.c.l.b16 %v180
    %v380 = vunpack.c.l.b16 %v181
    %v381 = vunpack.c.l.b16 %v182
    %v382 = vunpack.c.l.b16 %v183
    %v383 = vunpack.c.l.b16 %v184
    %v384 = vunpack.c.l.b16 %v185
    %v385 = vunpack.c.l.b16 %v186
    %v386 = vunpack.c.l.b16 %v187
    %v387 = vunpack.c.l.b16 %v188
    %v388 = vunpack.c.l.b16 %v189
    %v389 = vunpack.c.l.b16 %v190
    %v390 = vunpack.c.l.b16 %v191
    %v391 = vunpack.c.l.b16 %v192
    %v392 = vunpack.c.l.b16 %v193
    %v393 = vunpack.c.l.b16 %v194
    %v394 = vunpack.c.l.b16 %v195
    %v395 = vunpack.c.l.b16 %v196
    %v396 = vunpack.c.l.b16 %v197
    %v397 = vunpack.c.l.b16 %v198
    %v398 = vunpack.c.l.b16 %v199
    %v399 = vunpack.c.l.b16 %v200
    %v400 = vunpack.c.l.b16 %v201
    %v401 = vunpack.c.l.b16 %v202
    %v402 = vunpack.c.l.b16 %v203
    %v403 = vunpack.c.l.b16 %v204
    %v404 = vunpack.c.l.b16 %v205
    %v405 = vunpack.c.l.b16 %v206
    %v406 = vunpack.c.l.b16 %v207
    %v407 = vunpack.c.l.b16 %v208
    %v408 = vunpack.c.l.b16 %v209
    %v409 = vunpack.c.l.b16 %v210
    %v410 = vunpack.c.l.b16 %v211
    %v411 = vunpack.c.l.b16 %v212
    %v412 = vunpack.c.l.b16 %v213
    %v413 = vunpack.c.l.b16 %v214
    %v414 = vunpack.c.l.b16 %v215
    %v415 = vunpack.c.l.b16 %v216
    %v416 = vunpack.c.l.b16 %v217
    %v417 = vunpack.c.l.b16 %v218
    %v418 = vunpack.c.l.b16 %v219
    %v419 = vunpack.c.l.b16 %v220
    %v420 = vunpack.c.l.b16 %v221
    %v421 = vunpack.c.l.b16 %v222
    %v422 = vunpack.c.l.b16 %v223
    %v423 = vunpack.c.l.b16 %v224
    %v424 = vunpack.c.l.b16 %v225
    %v425 = vunpack.c.l.b16 %v226
    %v426 = vunpack.c.l.b16 %v227
    %v427 = vunpack.c.l.b16 %v228
    %v428 = vunpack.c.l.b16 %v229
    %v429 = vunpack.c.l.b16 %v230
    %v430 = vunpack.c.l.b16 %v231
    %v431 = vunpack.c.l.b16 %v232
    %v432 = vunpack.c.l.b16 %v233
    %v433 = vunpack.c.l.b16 %v234
    %v434 = vunpack.c.l.b16 %v235
    %v435 = vunpack.c.l.b16 %v236
    %v436 = vunpack.c.l.b16 %v237
    %v437 = vunpack.c.l.b16 %v238
    %v438 = vunpack.c.l.b16 %v239
    %v439 = vunpack.c.l.b16 %v240
    %v440 = vunpack.c.l.b16 %v241
    %v441 = vunpack.c.l.b16 %v242
    %v442 = vunpack.c.l.b16 %v243
    %v443 = vunpack.c.l.b16 %v244
    %v444 = vunpack.c.l.b16 %v245
    %v445 = vunpack.c.l.b16 %v246
    %v446 = vunpack.c.l.b16 %v247
    %v447 = vunpack.c.l.b16 %v248
    %v448 = vunpack.c.l.b16 %v249
    %v449 = vunpack.c.l.b16 %v250
    %v450 = vunpack.c.l.b16 %v251
    %v451 = vunpack.c.l.b16 %v252
    %v452 = vunpack.c.l.b16 %v253
    %v453 = vunpack.c.l.b16 %v254
    %v454 = vunpack.c.l.b16 %v255
    %v455 = vunpack.c.l.b16 %v256
    %v456 = vpack.c.b16 %v361, %v360
    %v457 = vpack.c.b16 %v363, %v362
    %v458 = vpack.c.b16 %v365, %v364
    %v459 = vpack.c.b16 %v367, %v366
    %v460 = vpack.c.b16 %v369, %v368
    %v461 = vpack.c.b16 %v371, %v370
    %v462 = vpack.c.b16 %v373, %v372
    %v463 = vpack.c.b16 %v375, %v374
    %v464 = vpack.c.b16 %v377, %v376
    %v465 = vpack.c.b16 %v379, %v378
    %v466 = vpack.c.b16 %v381, %v380
    %v467 = vpack.c.b16 %v383, %v382
    %v468 = vpack.c.b16 %v385, %v384
    %v469 = vpack.c.b16 %v387, %v386
    %v470 = vpack.c.b16 %v389, %v388
    %v471 = vpack.c.b16 %v391, %v390
    %v472 = vpack.c.b16 %v393, %v392
    %v473 = vpack.c.b16 %v395, %v394
    %v474 = vpack.c.b16 %v397, %v396
    %v475 = vpack.c.b16 %v399, %v398
    %v476 = vpack.c.b16 %v401, %v400
    %v477 = vpack.c.b16 %v403, %v402
    %v478 = vpack.c.b16 %v405, %v404
    %v479 = vpack.c.b16 %v407, %v406
    %v480 = vpack.c.b16 %v409, %v408
    %v481 = vpack.c.b16 %v411, %v410
    %v482 = vpack.c.b16 %v413, %v412
    %v483 = vpack.c.b16 %v415, %v414
    %v484 = vpack.c.b16 %v417, %v416
    %v485 = vpack.c.b16 %v419, %v418
    %v486 = vpack.c.b16 %v421, %v420
    %v487 = vpack.c.b16 %v423, %v422
    %v488 = vpack.c.b16 %v425, %v424
    %v489 = vpack.c.b16 %v427, %v426
    %v490 = vpack.c.b16 %v429, %v428
    %v491 = vpack.c.b16 %v431, %v430
    %v492 = vpack.c.b16 %v433, %v432
    %v493 = vpack.c.b16 %v435, %v434
    %v494 = vpack.c.b16 %v437, %v436
    %v495 = vpack.c.b16 %v439, %v438
    %v496 = vpack.c.b16 %v441, %v440
    %v497 = vpack.c.b16 %v443, %v442
    %v498 = vpack.c.b16 %v445, %v444
    %v499 = vpack.c.b16 %v447, %v446
    %v500 = vpack.c.b16 %v449, %v448
    %v501 = vpack.c.b16 %v451, %v450
    %v502 = vpack.c.b16 %v453, %v452
    %v503 = vpack.c.b16 %v455, %v454
    %552 = vmatprep.subr.bf16.mxu0 0
    %553 = vmatpush1.bf16.msra.mxu0 %v456
    %554 = vmatprep.subr.bf16.mxu0 0
    %555 = vmatpush1.bf16.msra.mxu0 %v457
    %556 = vmatprep.subr.bf16.mxu0 0
    %557 = vmatpush1.bf16.msra.mxu0 %v458
    %558 = vmatprep.subr.bf16.mxu0 0
    %559 = vmatpush1.bf16.msra.mxu0 %v459
    %560 = vmatprep.subr.bf16.mxu0 0
    %561 = vmatpush1.bf16.msra.mxu0 %v460
    %562 = vmatprep.subr.bf16.mxu0 0
    %563 = vmatpush1.bf16.msra.mxu0 %v461
    %564 = vmatprep.subr.bf16.mxu0 0
    %565 = vmatpush1.bf16.msra.mxu0 %v462
    %566 = vmatprep.subr.bf16.mxu0 0
    %567 = vmatpush1.bf16.msra.mxu0 %v463
    %568 = vmatprep.subr.bf16.mxu0 0
    %569 = vmatpush1.bf16.msra.mxu0 %v464
    %570 = vmatprep.subr.bf16.mxu0 0
    %571 = vmatpush1.bf16.msra.mxu0 %v465
    %572 = vmatprep.subr.bf16.mxu0 0
    %573 = vmatpush1.bf16.msra.mxu0 %v466
    %574 = vmatprep.subr.bf16.mxu0 0
    %575 = vmatpush1.bf16.msra.mxu0 %v467
    %576 = vmatprep.subr.bf16.mxu0 0
    %577 = vmatpush1.bf16.msra.mxu0 %v468
    %578 = vmatprep.subr.bf16.mxu0 0
    %579 = vmatpush1.bf16.msra.mxu0 %v469
    %580 = vmatprep.subr.bf16.mxu0 0
    %581 = vmatpush1.bf16.msra.mxu0 %v470
    %582 = vmatprep.subr.bf16.mxu0 0
    %583 = vmatpush1.bf16.msra.mxu0 %v471
    %584 = vmatprep.mubr.bf16.mxu0 %v156
    %585 = vmatmul.mubr.bf16.gmra.mrb[0].mxu0 %v155
    %v586 = vpop.f32.mrb[0].mxu0
    %v587 = vadd.f32 %v262, %v586
    %v588 = vpop.f32.mrb[0].mxu0
    %v589 = vpop.f32.mrb[0].mxu0
    %v590 = vpop.f32.mrb[0].mxu0
    %591 = vdwg.mxu0
    %592 = vmatprep.subr.bf16.mxu0 0
    %593 = vmatpush1.bf16.msra.mxu0 %v472
    %594 = vmatprep.subr.bf16.mxu0 0
    %595 = vmatpush1.bf16.msra.mxu0 %v473
    %596 = vmatprep.subr.bf16.mxu0 0
    %597 = vmatpush1.bf16.msra.mxu0 %v474
    %598 = vmatprep.subr.bf16.mxu0 0
    %599 = vmatpush1.bf16.msra.mxu0 %v475
    %600 = vmatprep.subr.bf16.mxu0 0
    %601 = vmatpush1.bf16.msra.mxu0 %v476
    %602 = vmatprep.subr.bf16.mxu0 0
    %603 = vmatpush1.bf16.msra.mxu0 %v477
    %604 = vmatprep.subr.bf16.mxu0 0
    %605 = vmatpush1.bf16.msra.mxu0 %v478
    %606 = vmatprep.subr.bf16.mxu0 0
    %607 = vmatpush1.bf16.msra.mxu0 %v479
    %608 = vmatprep.subr.bf16.mxu0 0
    %609 = vmatpush1.bf16.msra.mxu0 %v480
    %610 = vmatprep.subr.bf16.mxu0 0
    %611 = vmatpush1.bf16.msra.mxu0 %v481
    %612 = vmatprep.subr.bf16.mxu0 0
    %613 = vmatpush1.bf16.msra.mxu0 %v482
    %614 = vmatprep.subr.bf16.mxu0 0
    %615 = vmatpush1.bf16.msra.mxu0 %v483
    %616 = vmatprep.subr.bf16.mxu0 0
    %617 = vmatpush1.bf16.msra.mxu0 %v484
    %618 = vmatprep.subr.bf16.mxu0 0
    %619 = vmatpush1.bf16.msra.mxu0 %v485
    %620 = vmatprep.subr.bf16.mxu0 0
    %621 = vmatpush1.bf16.msra.mxu0 %v486
    %622 = vmatprep.subr.bf16.mxu0 0
    %623 = vmatpush1.bf16.msra.mxu0 %v487
    %624 = vmatprep.mubr.bf16.mxu0 %v158
    %625 = vmatmul.mubr.bf16.gmra.mrb[0].mxu0 %v157
    %v626 = vpop.f32.mrb[0].mxu0
    %v627 = vadd.f32 %v587, %v626
    %v628 = vpop.f32.mrb[0].mxu0
    %v629 = vpop.f32.mrb[0].mxu0
    %v630 = vpop.f32.mrb[0].mxu0
    %631 = vdwg.mxu0
    %632 = vmatprep.subr.bf16.mxu0 0
    %633 = vmatpush1.bf16.msra.mxu0 %v488
    %634 = vmatprep.subr.bf16.mxu0 0
    %635 = vmatpush1.bf16.msra.mxu0 %v489
    %636 = vmatprep.subr.bf16.mxu0 0
    %637 = vmatpush1.bf16.msra.mxu0 %v490
    %638 = vmatprep.subr.bf16.mxu0 0
    %639 = vmatpush1.bf16.msra.mxu0 %v491
    %640 = vmatprep.subr.bf16.mxu0 0
    %641 = vmatpush1.bf16.msra.mxu0 %v492
    %642 = vmatprep.subr.bf16.mxu0 0
    %643 = vmatpush1.bf16.msra.mxu0 %v493
    %644 = vmatprep.subr.bf16.mxu0 0
    %645 = vmatpush1.bf16.msra.mxu0 %v494
    %646 = vmatprep.subr.bf16.mxu0 0
    %647 = vmatpush1.bf16.msra.mxu0 %v495
    %648 = vmatprep.subr.bf16.mxu0 0
    %649 = vmatpush1.bf16.msra.mxu0 %v496
    %650 = vmatprep.subr.bf16.mxu0 0
    %651 = vmatpush1.bf16.msra.mxu0 %v497
    %652 = vmatprep.subr.bf16.mxu0 0
    %653 = vmatpush1.bf16.msra.mxu0 %v498
    %654 = vmatprep.subr.bf16.mxu0 0
    %655 = vmatpush1.bf16.msra.mxu0 %v499
    %656 = vmatprep.subr.bf16.mxu0 0
    %657 = vmatpush1.bf16.msra.mxu0 %v500
    %658 = vmatprep.subr.bf16.mxu0 0
    %659 = vmatpush1.bf16.msra.mxu0 %v501
    %660 = vmatprep.subr.bf16.mxu0 0
    %661 = vmatpush1.bf16.msra.mxu0 %v502
    %662 = vmatprep.subr.bf16.mxu0 0
    %663 = vmatpush1.bf16.msra.mxu0 %v503
    %664 = vmatprep.mubr.bf16.mxu0 %v160
    %665 = vmatmul.mubr.bf16.gmra.mrb[0].mxu0 %v159
    %v666 = vpop.f32.mrb[0].mxu0
    %v667 = vadd.f32 %v627, %v666
    %v668 = vpop.f32.mrb[0].mxu0
    %v669 = vpop.f32.mrb[0].mxu0
    %v670 = vpop.f32.mrb[0].mxu0
    %671 = vdwg.mxu0
    %v672 = vmax.f32 %v667, 0.0
    %v673 = vpack.c.bf16 %v672, %v672
    %v674 = vld [vmem:[#allocation8] sm:$0xf]
    %v675 = vld [vmem:[#allocation8 + $0x4] sm:$0xf]
    %v676 = vld [vmem:[#allocation8 + $0x8] sm:$0xf]
    %v677 = vld [vmem:[#allocation8 + $0xc] sm:$0xf]
    %v678 = vld [vmem:[#allocation8 + $0x10] sm:$0xf]
    %v679 = vld [vmem:[#allocation8 + $0x14] sm:$0xf]
    %v680 = vld [vmem:[#allocation8 + $0x18] sm:$0xf]
    %v681 = vld [vmem:[#allocation8 + $0x1c] sm:$0xf]
    %v682 = vld [vmem:[#allocation8 + $0x20] sm:$0xf]
    %v683 = vld [vmem:[#allocation8 + $0x24] sm:$0xf]
    %v684 = vld [vmem:[#allocation8 + $0x28] sm:$0xf]
    %v685 = vld [vmem:[#allocation8 + $0x2c] sm:$0xf]
    %v686 = vld [vmem:[#allocation8 + $0x30] sm:$0xf]
    %v687 = vld [vmem:[#allocation8 + $0x34] sm:$0xf]
    %v688 = vld [vmem:[#allocation8 + $0x38] sm:$0xf]
    %v689 = vld [vmem:[#allocation8 + $0x3c] sm:$0xf]
    %v690 = vld [vmem:[%s5] sm:$0x1]
    %v692 = vlaneseq
    %v693 = vshrl.u32 %v692, 7
    %v694 = vsub.s32 0, %v693
    %v695 = vrot.slane %v690, %v694
    %v713 = vunpack.c.l.b16 %v674
    %v714 = vunpack.c.l.b16 %v675
    %v715 = vunpack.c.l.b16 %v676
    %v716 = vunpack.c.l.b16 %v677
    %v717 = vunpack.c.l.b16 %v678
    %v718 = vunpack.c.l.b16 %v679
    %v719 = vunpack.c.l.b16 %v680
    %v720 = vunpack.c.l.b16 %v681
    %v721 = vunpack.c.l.b16 %v682
    %v722 = vunpack.c.l.b16 %v683
    %v723 = vunpack.c.l.b16 %v684
    %v724 = vunpack.c.l.b16 %v685
    %v725 = vunpack.c.l.b16 %v686
    %v726 = vunpack.c.l.b16 %v687
    %v727 = vunpack.c.l.b16 %v688
    %v728 = vunpack.c.l.b16 %v689
    %v729 = vpack.c.b16 %v714, %v713
    %v730 = vpack.c.b16 %v716, %v715
    %v731 = vpack.c.b16 %v718, %v717
    %v732 = vpack.c.b16 %v720, %v719
    %v733 = vpack.c.b16 %v722, %v721
    %v734 = vpack.c.b16 %v724, %v723
    %v735 = vpack.c.b16 %v726, %v725
    %v736 = vpack.c.b16 %v728, %v727
    %745 = vmatprep.subr.bf16.mxu0 0
    %746 = vmatpush1.bf16.msra.mxu0 %v729
    %747 = vmatprep.subr.bf16.mxu0 0
    %748 = vmatpush1.bf16.msra.mxu0 %v730
    %749 = vmatprep.subr.bf16.mxu0 0
    %750 = vmatpush1.bf16.msra.mxu0 %v731
    %751 = vmatprep.subr.bf16.mxu0 0
    %752 = vmatpush1.bf16.msra.mxu0 %v732
    %753 = vmatprep.subr.bf16.mxu0 0
    %754 = vmatpush1.bf16.msra.mxu0 %v733
    %755 = vmatprep.subr.bf16.mxu0 0
    %756 = vmatpush1.bf16.msra.mxu0 %v734
    %757 = vmatprep.subr.bf16.mxu0 0
    %758 = vmatpush1.bf16.msra.mxu0 %v735
    %759 = vmatprep.subr.bf16.mxu0 0
    %760 = vmatpush1.bf16.msra.mxu0 %v736
    %761 = vmatprep.subr.bf16.mxu0 0
    %762 = vmatpush1.bf16.msra.mxu0 0
    %763 = vmatprep.subr.bf16.mxu0 0
    %764 = vmatpush1.bf16.msra.mxu0 0
    %765 = vmatprep.subr.bf16.mxu0 0
    %766 = vmatpush1.bf16.msra.mxu0 0
    %767 = vmatprep.subr.bf16.mxu0 0
    %768 = vmatpush1.bf16.msra.mxu0 0
    %769 = vmatprep.subr.bf16.mxu0 0
    %770 = vmatpush1.bf16.msra.mxu0 0
    %771 = vmatprep.subr.bf16.mxu0 0
    %772 = vmatpush1.bf16.msra.mxu0 0
    %773 = vmatprep.subr.bf16.mxu0 0
    %774 = vmatpush1.bf16.msra.mxu0 0
    %775 = vmatprep.subr.bf16.mxu0 0
    %776 = vmatpush1.bf16.msra.mxu0 0
    %777 = vmatprep.mubr.bf16.mxu0 0
    %778 = vmatmul.mubr.bf16.gmra.mrb[0].mxu0 %v673
    %v779 = vpop.f32.mrb[0].mxu0
    %v780 = vadd.f32 %v695, %v779
    %v781 = vpop.f32.mrb[0].mxu0
    %v782 = vpop.f32.mrb[0].mxu0
    %v783 = vpop.f32.mrb[0].mxu0
    %784 = vdwg.mxu0
    %785 = vst [vmem:[#allocation10] sm:$0xff] %v780
    // Predicated region
    $region42: #{tpu_custom_call.1} parent=1 // pred_check
      _
    $region43: #{tpu_custom_call.1} parent=1 // pred_check_branch
      %787 = sbr.rel (0) target = $region45
    $region44: #{tpu_custom_call.1} parent=1 // pred_region
      %s789 = ssub.s32 128, 128
      %790 = vsyncadd [#allocation4], %s789
      %s792 = sshll.u32 [#allocation10], 4
      %s793 = int_to_ptr.vmem [resolvable:$true] %s792
      %795 = dma.vmem_to_hbm [thread:$0]  %s793, 128, %s6, [#allocation4]
    $region45: #{tpu_custom_call.1} parent=1 // pred_fallthru
      _
    // Predicated region
    $region46: #{tpu_custom_call.1} parent=1 // pred_check
      _
    $region47: #{tpu_custom_call.1} parent=1 // pred_check_branch
      %797 = sbr.rel (0) target = $region49
    $region48: #{tpu_custom_call.1} parent=1 // pred_region
      %798 = dma.done [#allocation4], 128
    $region49: #{tpu_custom_call.1} parent=1 // pred_fallthru
      _
    %799 = vsyncpa [#allocation3], 1
    %800 = vsyncpa [#allocation6], 1
    %801 = vsyncpa [#allocation9], 1
    %802 = vsyncpa [#allocation4], 1

</llo_original>
